<compile_context>
chip_gen: v7x
topology: tpu7x:2x2x1
jax: 0.10.0
libtpu: 0.0.40
codegen_flags: <defaults>
</compile_context>

<pallas_src>
import functools

import jax
import jax.numpy as jnp
from jax.experimental import pallas as pl
from jax.experimental.pallas import tpu as pltpu


def _round_up(x, m):
    return (x + m - 1) // m * m


# ----------------------------- Pallas kernel ------------------------------

def _fused_cnn_head_kernel(p_ref, w_ref, b_ref, fcw_ref, fcb_ref, o_ref,
                           *, NB, Lq, HW, inv_hw, Cout_pad):
    """One NB-image batch tile, fully fused:
       3x3 conv as a single lane-dense bf16 matmul (f32 accum) + bias + ReLU
       + per-image global-average-pool (VPU column reduce) + bf16 FC."""
    # --- conv: one fat matmul over all NB images ---
    conv = jnp.dot(p_ref[...], w_ref[...],
                   preferred_element_type=jnp.float32)      # (NB*Lq, Cout_pad)
    act = jnp.maximum(conv + b_ref[...], 0.0)               # f32

    # --- per-image masked mean-pool; pack rows into one (NB, Cout_pad) tile ---
    rowid = jax.lax.broadcasted_iota(jnp.int32, (NB, Cout_pad), 0)
    pooled = jnp.zeros((NB, Cout_pad), jnp.float32)
    for b in range(NB):                                      # NB <= 8, unrolled
        s = jnp.sum(act[b * Lq:b * Lq + HW, :], axis=0, keepdims=True)
        pooled = pooled + jnp.where(rowid == b, s, 0.0)
    pooled = pooled * inv_hw                                 # (NB, Cout_pad)

    # --- FC: bf16 inputs, f32 accumulation ---
    out = jnp.dot(pooled.astype(jnp.bfloat16), fcw_ref[...],
                  preferred_element_type=jnp.float32) + fcb_ref[...]
    o_ref[...] = out                                         # (NB, Ncls_pad)


# ------------------------------ JAX wrapper --------------------------------

def model_skfac_forward(x, params):
    """Equivalent of Model_SKFAC.forward(x) == self.net(x)."""
    conv_w, conv_b, fc_w, fc_b = params
    N, C, H, W = x.shape
    Cout = conv_w.shape[0]
    Nclass = fc_w.shape[0]
    HW = H * W

    # Batch tile: amortize the ~0.35us/step pipeline overhead, but keep the
    # grid length >= 2 so v7x's two TensorCores both get work.
    NB = max(1, min(8, N // 2)) if N > 1 else 1
    G = -(-N // NB)                       # ceil-div
    Npad = G * NB

    Lq = _round_up(HW, 16)                # bf16-sublane-friendly rows / image
    K = 9 * C
    K_pad = _round_up(K, 128)             # lane-dense contraction width
    Cout_pad = _round_up(Cout, 128)       # lane-dense conv output width
    Ncls_pad = _round_up(Nclass, 128)     # lane-dense final store

    # ---- layout plumbing (plain JAX): lane-dense im2col slab in bf16 ----
    xp = jnp.pad(x, ((0, 0), (0, 0), (1, 1), (1, 1)))
    cols = [xp[:, :, kh:kh + H, kw:kw + W]
            for kh in range(3) for kw in range(3)]           # 9 x [N,C,H,W]
    p = jnp.stack(cols, axis=2).reshape(N, C * 9, HW)
    p = jnp.transpose(p, (0, 2, 1))                          # (N, HW, 9C)
    p = jnp.pad(p, ((0, Npad - N), (0, Lq - HW), (0, K_pad - K)))
    xf = p.reshape(Npad * Lq, K_pad).astype(jnp.bfloat16)    # (Npad*Lq, K_pad)

    # conv weights: (Cout, C, 3, 3) -> (K_pad, Cout_pad), rows ordered (c,kh,kw)
    w2 = conv_w.reshape(Cout, C * 9).T
    w_all = jnp.pad(w2, ((0, K_pad - K), (0, Cout_pad - Cout)))
    w_all = w_all.astype(jnp.bfloat16)

    b_row = jnp.pad(conv_b, (0, Cout_pad - Cout)).reshape(1, Cout_pad)
    b_row = b_row.astype(jnp.float32)

    fcw = jnp.pad(fc_w.T, ((0, Cout_pad - Cout), (0, Ncls_pad - Nclass)))
    fcw = fcw.astype(jnp.bfloat16)
    fcb = jnp.pad(fc_b, (0, Ncls_pad - Nclass)).reshape(1, Ncls_pad)
    fcb = fcb.astype(jnp.float32)

    kernel = functools.partial(_fused_cnn_head_kernel, NB=NB, Lq=Lq, HW=HW,
                               inv_hw=1.0 / float(HW), Cout_pad=Cout_pad)

    flops = (2 * Npad * Lq * K_pad * Cout_pad        # conv matmul
             + 3 * Npad * Lq * Cout_pad              # bias + relu + pool
             + 2 * Npad * Cout_pad * Ncls_pad)       # fc matmul
    bytes_accessed = int(xf.size * 2 + w_all.size * 2 + fcw.size * 2
                         + (b_row.size + fcb.size) * 4
                         + Npad * Ncls_pad * 4)

    out = pl.pallas_call(
        kernel,
        out_shape=jax.ShapeDtypeStruct((G, NB, Ncls_pad), jnp.float32),
        grid=(G,),
        in_specs=[
            pl.BlockSpec((NB * Lq, K_pad), lambda n: (n, 0)),   # im2col tile
            pl.BlockSpec((K_pad, Cout_pad), lambda n: (0, 0)),  # conv weights
            pl.BlockSpec((1, Cout_pad), lambda n: (0, 0)),      # conv bias
            pl.BlockSpec((Cout_pad, Ncls_pad), lambda n: (0, 0)),  # FC weights
            pl.BlockSpec((1, Ncls_pad), lambda n: (0, 0)),      # FC bias
        ],
        out_specs=pl.BlockSpec((None, NB, Ncls_pad), lambda n: (n, 0, 0)),
        compiler_params=pltpu.CompilerParams(
            dimension_semantics=("parallel",),
            vmem_limit_bytes=32 * 1024 * 1024),
        cost_estimate=pl.CostEstimate(
            flops=flops, transcendentals=0, bytes_accessed=bytes_accessed),
    )(xf, w_all, b_row, fcw, fcb)

    return out.reshape(Npad, Ncls_pad)[:N, :Nclass]


# ----------------------- reference (plain JAX, no Pallas) -------------------

def _im2col_3x3_same_ref(x):
    N, C, H, W = x.shape
    xp = jnp.pad(x, ((0, 0), (0, 0), (1, 1), (1, 1)))
    cols = [xp[:, :, kh:kh + H, kw:kw + W]
            for kh in range(3) for kw in range(3)]            # 9 x [N,C,H,W]
    p = jnp.stack(cols, axis=2)                               # [N, C, 9, H, W]
    p = p.reshape(N, C * 9, H * W)
    p = jnp.transpose(p, (0, 2, 1))                           # [N, H*W, C*9]
    return p.reshape(N * H * W, C * 9)


# --------------------------------- main ------------------------------------

if __name__ == "__main__":
    key = jax.random.PRNGKey(0)
    kx, kw1, kb1, kw2, kb2 = jax.random.split(key, 5)

    N, C, H, W = 2, 4, 16, 16
    Cout, Nclass = 8, 10

    x = jax.random.normal(kx, (N, C, H, W), dtype=jnp.float32)

    # deterministic params (torch layouts: conv [Cout,Cin,3,3], fc [out,in])
    conv_w = 0.1 * jax.random.normal(kw1, (Cout, C, 3, 3), dtype=jnp.float32)
    conv_b = 0.1 * jax.random.normal(kb1, (Cout,), dtype=jnp.float32)
    fc_w = 0.1 * jax.random.normal(kw2, (Nclass, Cout), dtype=jnp.float32)
    fc_b = 0.1 * jax.random.normal(kb2, (Nclass,), dtype=jnp.float32)
    params = (conv_w, conv_b, fc_w, fc_b)

    out = jax.block_until_ready(model_skfac_forward(x, params))

    # reference with the same bf16 rounding of the conv / FC matmul inputs
    xb = x.astype(jnp.bfloat16).astype(jnp.float32)
    wb = conv_w.astype(jnp.bfloat16).astype(jnp.float32)
    patches = _im2col_3x3_same_ref(xb)
    ref_act = jnp.maximum(
        jnp.dot(patches, wb.reshape(Cout, C * 9).T,
                precision=jax.lax.Precision.HIGHEST) + conv_b[None, :], 0.0)
    ref_pool = ref_act.reshape(N, H * W, Cout).mean(axis=1)
    pool_b = ref_pool.astype(jnp.bfloat16).astype(jnp.float32)
    fcw_b = fc_w.astype(jnp.bfloat16).astype(jnp.float32)
    ref = jnp.dot(pool_b, fcw_b.T,
                  precision=jax.lax.Precision.HIGHEST) + fc_b[None, :]

    assert out.shape == (N, Nclass)
    # atol slightly above the previous run's 1e-4 to cover the deliberate bf16
    # quantization of the FC inputs (matched in the reference); real layout /
    # indexing bugs produce errors orders of magnitude larger.
    assert jnp.allclose(out, ref, rtol=1e-3, atol=3e-4), (
        float(jnp.max(jnp.abs(out - ref))))

    print("KERNEL_OK")
</pallas_src>

<mosaic_0001>
module attributes {stable_mosaic.version = 11 : i64} {
  func.func @_fused_cnn_head_kernel(%arg0: i32, %arg1: memref<256x128xbf16, #tpu.memory_space<vmem>>, %arg2: memref<128x128xbf16, #tpu.memory_space<vmem>>, %arg3: memref<1x128xf32, #tpu.memory_space<vmem>>, %arg4: memref<128x128xbf16, #tpu.memory_space<vmem>>, %arg5: memref<1x128xf32, #tpu.memory_space<vmem>>, %arg6: memref<1x1x128xf32, #tpu.memory_space<vmem>>) attributes {dimension_semantics = [#tpu.dimension_semantics<parallel>], iteration_bounds = array<i64: 2>, scalar_prefetch = 0 : i64, scratch_operands = 0 : i64, tpu.core_type = #tpu.core_type<tc>, window_params = [{transform_indices = @transform_0, window_bounds = array<i64: 256, 128>}, {pipeline_mode = #tpu.pipeline_mode<synchronous>, transform_indices = @transform_1, window_bounds = array<i64: 128, 128>}, {pipeline_mode = #tpu.pipeline_mode<synchronous>, transform_indices = @transform_2, window_bounds = array<i64: 1, 128>}, {pipeline_mode = #tpu.pipeline_mode<synchronous>, transform_indices = @transform_3, window_bounds = array<i64: 128, 128>}, {pipeline_mode = #tpu.pipeline_mode<synchronous>, transform_indices = @transform_4, window_bounds = array<i64: 1, 128>}, {transform_indices = @transform_5, window_bounds = array<i64: 1, 1, 128>}]} {
    %c0 = arith.constant 0 : index
    %c0_0 = arith.constant 0 : index
    %0 = vector.load %arg1[%c0, %c0_0] : memref<256x128xbf16, #tpu.memory_space<vmem>>, vector<256x128xbf16>
    %c0_1 = arith.constant 0 : index
    %c0_2 = arith.constant 0 : index
    %1 = vector.load %arg2[%c0_1, %c0_2] : memref<128x128xbf16, #tpu.memory_space<vmem>>, vector<128x128xbf16>
    %cst = arith.constant dense<0.000000e+00> : vector<256x128xf32>
    %2 = tpu.matmul %0, %1, %cst {dimension_numbers = #tpu.dot_dimension_numbers<[1], [0], [0], [1], [0, 0, 1, 1], [], []>} : vector<256x128xbf16>, vector<128x128xbf16>, vector<256x128xf32> -> vector<256x128xf32>
    %c0_3 = arith.constant 0 : index
    %c0_4 = arith.constant 0 : index
    %3 = vector.load %arg3[%c0_3, %c0_4] : memref<1x128xf32, #tpu.memory_space<vmem>>, vector<1x128xf32>
    %4 = vector.broadcast %3 : vector<1x128xf32> to vector<256x128xf32>
    %5 = arith.addf %2, %4 : vector<256x128xf32>
    %cst_5 = arith.constant 0.000000e+00 : f32
    %6 = vector.broadcast %cst_5 : f32 to vector<256x128xf32>
    %7 = arith.maximumf %5, %6 : vector<256x128xf32>
    %8 = tpu.iota {dimensions = array<i32: 0>} : vector<1x128xi32>
    %cst_6 = arith.constant 0.000000e+00 : f32
    %9 = vector.broadcast %cst_6 : f32 to vector<1x128xf32>
    %cst_7 = arith.constant dense<0.000000e+00> : vector<128xf32>
    %10 = vector.multi_reduction <add>, %7, %cst_7 [0] : vector<256x128xf32> to vector<128xf32>
    %11 = vector.shape_cast %10 : vector<128xf32> to vector<1x128xf32>
    %c0_i32 = arith.constant 0 : i32
    %12 = vector.broadcast %c0_i32 : i32 to vector<1x128xi32>
    %13 = arith.cmpi eq, %8, %12 : vector<1x128xi32>
    %cst_8 = arith.constant 0.000000e+00 : f32
    %14 = vector.broadcast %cst_8 : f32 to vector<1x128xf32>
    %15 = arith.select %13, %11, %14 : vector<1x128xi1>, vector<1x128xf32>
    %16 = arith.addf %9, %15 : vector<1x128xf32>
    %cst_9 = arith.constant 3.906250e-03 : f32
    %17 = vector.broadcast %cst_9 : f32 to vector<1x128xf32>
    %18 = arith.mulf %16, %17 : vector<1x128xf32>
    %19 = arith.truncf %18 : vector<1x128xf32> to vector<1x128xbf16>
    %c0_10 = arith.constant 0 : index
    %c0_11 = arith.constant 0 : index
    %20 = vector.load %arg4[%c0_10, %c0_11] : memref<128x128xbf16, #tpu.memory_space<vmem>>, vector<128x128xbf16>
    %cst_12 = arith.constant dense<0.000000e+00> : vector<1x128xf32>
    %21 = tpu.matmul %19, %20, %cst_12 {dimension_numbers = #tpu.dot_dimension_numbers<[1], [0], [0], [1], [0, 0, 1, 1], [], []>} : vector<1x128xbf16>, vector<128x128xbf16>, vector<1x128xf32> -> vector<1x128xf32>
    %c0_13 = arith.constant 0 : index
    %c0_14 = arith.constant 0 : index
    %22 = vector.load %arg5[%c0_13, %c0_14] : memref<1x128xf32, #tpu.memory_space<vmem>>, vector<1x128xf32>
    %23 = arith.addf %21, %22 : vector<1x128xf32>
    %c0_15 = arith.constant 0 : index
    %c0_16 = arith.constant 0 : index
    %c0_17 = arith.constant 0 : index
    %24 = vector.load %arg6[%c0_15, %c0_16, %c0_17] : memref<1x1x128xf32, #tpu.memory_space<vmem>>, vector<1x1x128xf32>
    %25 = vector.shape_cast %24 : vector<1x1x128xf32> to vector<1x128xf32>
    %26 = vector.shape_cast %23 : vector<1x128xf32> to vector<1x1x128xf32>
    tpu.vector_store %arg6[%c0_15, %c0_16, %c0_17], %26 {strides = array<i32>} : memref<1x1x128xf32, #tpu.memory_space<vmem>>, vector<1x1x128xf32>,
    return
  }
  func.func @transform_0(%arg0: i32) -> (i32, i32) {
    %c0_i32 = arith.constant 0 : i32
    %c0_i32_0 = arith.constant 0 : i32
    return %arg0, %c0_i32 : i32, i32
  }
  func.func @transform_1(%arg0: i32) -> (i32, i32) {
    %c0_i32 = arith.constant 0 : i32
    %c0_i32_0 = arith.constant 0 : i32
    %c0_i32_1 = arith.constant 0 : i32
    return %c0_i32, %c0_i32_0 : i32, i32
  }
  func.func @transform_2(%arg0: i32) -> (i32, i32) {
    %c0_i32 = arith.constant 0 : i32
    %c0_i32_0 = arith.constant 0 : i32
    %c0_i32_1 = arith.constant 0 : i32
    return %c0_i32, %c0_i32_0 : i32, i32
  }
  func.func @transform_3(%arg0: i32) -> (i32, i32) {
    %c0_i32 = arith.constant 0 : i32
    %c0_i32_0 = arith.constant 0 : i32
    %c0_i32_1 = arith.constant 0 : i32
    return %c0_i32, %c0_i32_0 : i32, i32
  }
  func.func @transform_4(%arg0: i32) -> (i32, i32) {
    %c0_i32 = arith.constant 0 : i32
    %c0_i32_0 = arith.constant 0 : i32
    %c0_i32_1 = arith.constant 0 : i32
    return %c0_i32, %c0_i32_0 : i32, i32
  }
  func.func @transform_5(%arg0: i32) -> (i32, i32, i32) {
    %c0_i32 = arith.constant 0 : i32
    %c0_i32_0 = arith.constant 0 : i32
    %c0_i32_1 = arith.constant 0 : i32
    return %arg0, %c0_i32, %c0_i32_0 : i32, i32, i32
  }
}

</mosaic_0001>

<llo_original>
// kernel: tpu_custom_call.1
$region0: #{tpu_custom_call.1}
  #allocation0 [shape = 'u32[]', space=smem, size = 0x4, offset = 0x4, fixed_abs, tag = 'smem constant byte address 0x4 - core index']
  #allocation1 [shape = 'u32[144,128]{1,0:T(1,128)}', space=vmem, size = 0x12000, scoped, tag = 'internal scratch']
  %s0 = inlined_call_operand.hbm [shape: bf16[512,128], index: 0, kind: input, shape index: {}]
  %s1 = inlined_call_operand.hbm [shape: bf16[128,128], index: 1, kind: input, shape index: {}]
  %s2 = inlined_call_operand.vmem [shape: f32[1,128], index: 2, kind: input, shape index: {}]
  %s3 = inlined_call_operand.hbm [shape: bf16[128,128], index: 3, kind: input, shape index: {}]
  %s4 = inlined_call_operand.vmem [shape: f32[1,128], index: 4, kind: input, shape index: {}]
  %s5 = inlined_call_operand.hbm [shape: f32[2,1,128], index: 5, kind: output, shape index: {}]
  %s6 = sld [smem:[#allocation0]]
  $region65: #{tpu_custom_call.1} parent=0
    _
  %s8 = ssub.s32 1, %s6
  %s9 = scalar_select 0, %s8, %s6
  $region1: #{tpu_custom_call.1} parent=0
    #allocation2 [shape = 'u8[131072]{0}', space=vmem, size = 0x20000, scoped, tag = 'input window, operand 0']
    #allocation3 [shape = 's32[2]{0}', space=sflag, size = 0x8, scoped, tag = 'scoped memory for tpu_custom_call.1']
    #allocation4 [shape = 's32[2]{0}', space=sflag, size = 0x8, scoped, tag = 'scoped memory for tpu_custom_call.1']
    #allocation5 [shape = 'u8[32768]{0}', space=vmem, size = 0x8000, scoped, tag = 'input window, operand 1, single buffered']
    #allocation6 [shape = 's32[1]{0}', space=sflag, size = 0x4, scoped, tag = 'scoped memory for tpu_custom_call.1']
    #allocation7 [shape = 'u8[32768]{0}', space=vmem, size = 0x8000, scoped, tag = 'input window, operand 3, single buffered']
    #allocation8 [shape = 'u8[1024]{0}', space=vmem, size = 0x400, scoped, tag = 'output window, operand 0']
    %10 = vsyncpa [#allocation3], 0
    %s11 = scalar_lea.sflag [#allocation3], 1
    %12 = vsyncpa %s11, 0
    %13 = vsyncpa [#allocation6], 0
    %14 = vsyncpa [#allocation4], 0
    %s15 = scalar_lea.sflag [#allocation4], 1
    %16 = vsyncpa %s15, 0
    loop: start=0, step=1, limit=4
    $region2: #{tpu_custom_call.1} parent=1 // loop_pre_header
      _
    $region3: #{tpu_custom_call.1} parent=1 // loop_header
      %s18 = sphi 0, %s22
      %p19 = scmp.ge.s32.totalorder %s18, 4
      %s28 = sphi 0, %s30
      %s31 = sphi 0, %s28
      %s32 = sphi 0, %s31
      %s48 = sphi 0, %s32
      %s52 = sphi 0, %s52
      %s54 = sphi 0, %s52
      %s55 = sphi 0, %s54
      %s69 = sphi 0, %s55
      %s73 = sphi 0, %s73
      %s75 = sphi 0, %s73
      %s76 = sphi 0, %s75
      %s90 = sphi 0, %s76
      %s94 = sphi 0, %s94
      %s96 = sphi 0, %s94
      %s97 = sphi 0, %s96
      %s111 = sphi 0, %s97
      %s115 = sphi 0, %s115
      %s117 = sphi 0, %s115
      %s118 = sphi 0, %s117
      %s132 = sphi 0, %s118
      %s138 = sphi 0, %s140
      %s141 = sphi 0, %s138
      %s142 = sphi 0, %s141
      %s158 = sphi 0, %s142
    $region4: #{tpu_custom_call.1} parent=1 // loop_header_branch
      %21 = sbr.rel (%p19) target = $region8
    $region5: #{tpu_custom_call.1} parent=1 // loop_body
      %s23 = ssub.s32 %s18, 1
      %s24 = ssub.s32 %s18, 2
      %s25 = sadd.s32 %s18, 1
      %s26 = ssub.s32 %s18, %s25
      %p27 = scmp.eq.s32.totalorder %s26, 0
      %s29 = sadd.s32 %s28, 1
      %s30 = scalar_select %p27, %s28, %s29
      %p33 = pneg %p27
      %p34 = scmp.eq.s32.totalorder %s18, 1
      %p35 = por %p33, %p34
      %p36 = scmp.ne.s32.totalorder %s28, %s31
      %p37 = scmp.eq.s32.totalorder %s18, 0
      %p38 = por %p36, %p37
      %p39 = scmp.ne.s32.totalorder %s28, %s31
      %p40 = scmp.eq.s32.totalorder %s23, 1
      %p41 = por %p39, %p40
      %p42 = scmp.ne.s32.totalorder %s31, %s32
      %p43 = scmp.eq.s32.totalorder %s23, 0
      %p44 = por %p42, %p43
      %p45 = scmp.ne.s32.totalorder %s31, %s32
      %p46 = scmp.eq.s32.totalorder %s24, 1
      %p47 = por %p45, %p46
      %p49 = scmp.ne.s32.totalorder %s32, %s48
      %p50 = scmp.eq.s32.totalorder %s24, 0
      %p51 = por %p49, %p50
      %s53 = sadd.s32 %s52, 1
      %p56 = scmp.eq.s32.totalorder %s18, 1
      %p57 = scmp.ne.s32.totalorder %s52, %s54
      %p58 = scmp.eq.s32.totalorder %s18, 0
      %p59 = por %p57, %p58
      %p60 = scmp.ne.s32.totalorder %s52, %s54
      %p61 = scmp.eq.s32.totalorder %s23, 1
      %p62 = por %p60, %p61
      %p63 = scmp.ne.s32.totalorder %s54, %s55
      %p64 = scmp.eq.s32.totalorder %s23, 0
      %p65 = por %p63, %p64
      %p66 = scmp.ne.s32.totalorder %s54, %s55
      %p67 = scmp.eq.s32.totalorder %s24, 1
      %p68 = por %p66, %p67
      %p70 = scmp.ne.s32.totalorder %s55, %s69
      %p71 = scmp.eq.s32.totalorder %s24, 0
      %p72 = por %p70, %p71
      %s74 = sadd.s32 %s73, 1
      %p77 = scmp.eq.s32.totalorder %s18, 1
      %p78 = scmp.ne.s32.totalorder %s73, %s75
      %p79 = scmp.eq.s32.totalorder %s18, 0
      %p80 = por %p78, %p79
      %p81 = scmp.ne.s32.totalorder %s73, %s75
      %p82 = scmp.eq.s32.totalorder %s23, 1
      %p83 = por %p81, %p82
      %p84 = scmp.ne.s32.totalorder %s75, %s76
      %p85 = scmp.eq.s32.totalorder %s23, 0
      %p86 = por %p84, %p85
      %p87 = scmp.ne.s32.totalorder %s75, %s76
      %p88 = scmp.eq.s32.totalorder %s24, 1
      %p89 = por %p87, %p88
      %p91 = scmp.ne.s32.totalorder %s76, %s90
      %p92 = scmp.eq.s32.totalorder %s24, 0
      %p93 = por %p91, %p92
      %s95 = sadd.s32 %s94, 1
      %p98 = scmp.eq.s32.totalorder %s18, 1
      %p99 = scmp.ne.s32.totalorder %s94, %s96
      %p100 = scmp.eq.s32.totalorder %s18, 0
      %p101 = por %p99, %p100
      %p102 = scmp.ne.s32.totalorder %s94, %s96
      %p103 = scmp.eq.s32.totalorder %s23, 1
      %p104 = por %p102, %p103
      %p105 = scmp.ne.s32.totalorder %s96, %s97
      %p106 = scmp.eq.s32.totalorder %s23, 0
      %p107 = por %p105, %p106
      %p108 = scmp.ne.s32.totalorder %s96, %s97
      %p109 = scmp.eq.s32.totalorder %s24, 1
      %p110 = por %p108, %p109
      %p112 = scmp.ne.s32.totalorder %s97, %s111
      %p113 = scmp.eq.s32.totalorder %s24, 0
      %p114 = por %p112, %p113
      %s116 = sadd.s32 %s115, 1
      %p119 = scmp.eq.s32.totalorder %s18, 1
      %p120 = scmp.ne.s32.totalorder %s115, %s117
      %p121 = scmp.eq.s32.totalorder %s18, 0
      %p122 = por %p120, %p121
      %p123 = scmp.ne.s32.totalorder %s115, %s117
      %p124 = scmp.eq.s32.totalorder %s23, 1
      %p125 = por %p123, %p124
      %p126 = scmp.ne.s32.totalorder %s117, %s118
      %p127 = scmp.eq.s32.totalorder %s23, 0
      %p128 = por %p126, %p127
      %p129 = scmp.ne.s32.totalorder %s117, %s118
      %p130 = scmp.eq.s32.totalorder %s24, 1
      %p131 = por %p129, %p130
      %p133 = scmp.ne.s32.totalorder %s118, %s132
      %p134 = scmp.eq.s32.totalorder %s24, 0
      %p135 = por %p133, %p134
      %s136 = ssub.s32 %s18, %s25
      %p137 = scmp.eq.s32.totalorder %s136, 0
      %s139 = sadd.s32 %s138, 1
      %s140 = scalar_select %p137, %s138, %s139
      %p143 = pneg %p137
      %p144 = scmp.eq.s32.totalorder %s18, 1
      %p145 = por %p143, %p144
      %p146 = scmp.ne.s32.totalorder %s138, %s141
      %p147 = scmp.eq.s32.totalorder %s18, 0
      %p148 = por %p146, %p147
      %p149 = scmp.ne.s32.totalorder %s138, %s141
      %p150 = scmp.eq.s32.totalorder %s23, 1
      %p151 = por %p149, %p150
      %p152 = scmp.ne.s32.totalorder %s141, %s142
      %p153 = scmp.eq.s32.totalorder %s23, 0
      %p154 = por %p152, %p153
      %p155 = scmp.ne.s32.totalorder %s141, %s142
      %p156 = scmp.eq.s32.totalorder %s24, 1
      %p157 = por %p155, %p156
      %p159 = scmp.ne.s32.totalorder %s142, %s158
      %p160 = scmp.eq.s32.totalorder %s24, 0
      %p161 = por %p159, %p160
      %p162 = scmp.le.s32.totalorder 1, %s18
      %p163 = scmp.lt.s32.totalorder %s18, 3
      %p164 = pnand %p162, %p163
      %p165 = pneg %p164
      // Predicated region
      $region9: #{tpu_custom_call.1} parent=5 // pred_check
        _
      $region10: #{tpu_custom_call.1} parent=5 // pred_check_branch
        %167 = sbr.rel (%p164) target = $region12
      $region11: #{tpu_custom_call.1} parent=5 // pred_region
        %s168 = ssub.s32 %s18, 1
        // Predicated region
        $region13: #{tpu_custom_call.1} parent=11 // pred_check
          %p169 = pneg %p65
        $region14: #{tpu_custom_call.1} parent=11 // pred_check_branch
          %171 = sbr.rel (%p169) target = $region16
        $region15: #{tpu_custom_call.1} parent=11 // pred_region
          %s173 = ssub.s32 1024, 1024
          %174 = vsyncadd [#allocation6], %s173
          %s175 = sshll.u32 [#allocation5], 4
          %s176 = int_to_ptr.vmem [resolvable:$true] %s175
          %181 = dma.hbm_to_vmem [thread:$0]  %s1, 1024, %s176, [#allocation6], 64, 64, 4
        $region16: #{tpu_custom_call.1} parent=11 // pred_fallthru
          _
        // Predicated region
        $region17: #{tpu_custom_call.1} parent=11 // pred_check
          %p182 = pneg %p86
        $region18: #{tpu_custom_call.1} parent=11 // pred_check_branch
          %184 = sbr.rel (%p182) target = $region20
        $region19: #{tpu_custom_call.1} parent=11 // pred_region
          _
        $region20: #{tpu_custom_call.1} parent=11 // pred_fallthru
          _
        // Predicated region
        $region21: #{tpu_custom_call.1} parent=11 // pred_check
          %p185 = pneg %p107
        $region22: #{tpu_custom_call.1} parent=11 // pred_check_branch
          %187 = sbr.rel (%p185) target = $region24
        $region23: #{tpu_custom_call.1} parent=11 // pred_region
          %s189 = ssub.s32 1024, 1024
          %190 = vsyncadd [#allocation6], %s189
          %s191 = sshll.u32 [#allocation7], 4
          %s192 = int_to_ptr.vmem [resolvable:$true] %s191
          %197 = dma.hbm_to_vmem [thread:$0]  %s3, 1024, %s192, [#allocation6], 64, 64, 4
        $region24: #{tpu_custom_call.1} parent=11 // pred_fallthru
          _
        // Predicated region
        $region25: #{tpu_custom_call.1} parent=11 // pred_check
          %p198 = pneg %p128
        $region26: #{tpu_custom_call.1} parent=11 // pred_check_branch
          %200 = sbr.rel (%p198) target = $region28
        $region27: #{tpu_custom_call.1} parent=11 // pred_region
          _
        $region28: #{tpu_custom_call.1} parent=11 // pred_fallthru
          _
      $region12: #{tpu_custom_call.1} parent=5 // pred_fallthru
        _
      %p201 = scmp.lt.s32.totalorder %s18, 2
      // Predicated region
      $region29: #{tpu_custom_call.1} parent=5 // pred_check
        %p202 = pneg %p201
      $region30: #{tpu_custom_call.1} parent=5 // pred_check_branch
        %204 = sbr.rel (%p202) target = $region32
      $region31: #{tpu_custom_call.1} parent=5 // pred_region
        // Predicated region
        $region33: #{tpu_custom_call.1} parent=31 // pred_check
          %p205 = pneg %p38
        $region34: #{tpu_custom_call.1} parent=31 // pred_check_branch
          %207 = sbr.rel (%p205) target = $region36
        $region35: #{tpu_custom_call.1} parent=31 // pred_region
          %s208 = sand.u32 %s28, 1
          %s209 = scalar_lea.sflag [#allocation3], %s208
          %s210 = sand.u32 %s28, 1
          %s211 = smul.addr %s210, 128
          %s212 = scalar_lea.vmem [#allocation2], %s211
          %s213 = smul.u32 32, %s18
          %s215 = ssub.s32 2048, 2048
          %216 = vsyncadd %s209, %s215
          %s217 = smul.addr %s213, 64
          %s218 = scalar_lea.hbm %s0, %s217
          %s219 = sshll.u32 %s212, 4
          %s220 = int_to_ptr.vmem [resolvable:$true] %s219
          %225 = dma.hbm_to_vmem [thread:$0]  %s218, 2048, %s220, %s209, 64, 64, 4
        $region36: #{tpu_custom_call.1} parent=31 // pred_fallthru
          _
      $region32: #{tpu_custom_call.1} parent=5 // pred_fallthru
        _
      %p226 = scmp.le.s32.totalorder 1, %s18
      %p227 = scmp.lt.s32.totalorder %s18, 3
      %p228 = pnand %p226, %p227
      %p229 = pneg %p228
      // Predicated region
      $region37: #{tpu_custom_call.1} parent=5 // pred_check
        _
      $region38: #{tpu_custom_call.1} parent=5 // pred_check_branch
        %231 = sbr.rel (%p228) target = $region40
      $region39: #{tpu_custom_call.1} parent=5 // pred_region
        %s232 = ssub.s32 %s18, 1
        %s233 = sand.u32 %s31, 1
        %s234 = scalar_lea.sflag [#allocation3], %s233
        %s235 = sand.u32 %s31, 1
        %s236 = smul.addr %s235, 128
        %s237 = scalar_lea.vmem [#allocation2], %s236
        // Predicated region
        $region41: #{tpu_custom_call.1} parent=39 // pred_check
          %p238 = pneg %p44
        $region42: #{tpu_custom_call.1} parent=39 // pred_check_branch
          %240 = sbr.rel (%p238) target = $region44
        $region43: #{tpu_custom_call.1} parent=39 // pred_region
          %241 = dma.done %s234, 2048
        $region44: #{tpu_custom_call.1} parent=39 // pred_fallthru
          _
        // Predicated region
        $region45: #{tpu_custom_call.1} parent=39 // pred_check
          %p242 = pneg %p65
        $region46: #{tpu_custom_call.1} parent=39 // pred_check_branch
          %244 = sbr.rel (%p242) target = $region48
        $region47: #{tpu_custom_call.1} parent=39 // pred_region
          %245 = dma.done [#allocation6], 1024
        $region48: #{tpu_custom_call.1} parent=39 // pred_fallthru
          _
        // Predicated region
        $region49: #{tpu_custom_call.1} parent=39 // pred_check
          %p246 = pneg %p107
        $region50: #{tpu_custom_call.1} parent=39 // pred_check_branch
          %248 = sbr.rel (%p246) target = $region52
        $region51: #{tpu_custom_call.1} parent=39 // pred_region
          %249 = dma.done [#allocation6], 1024
        $region52: #{tpu_custom_call.1} parent=39 // pred_fallthru
          _
        %s250 = sand.u32 %s31, 1
        %s251 = scalar_lea.sflag [#allocation3], %s250
        %s252 = sand.u32 %s31, 1
        %s253 = smul.addr %s252, 128
        %s254 = scalar_lea.vmem [#allocation2], %s253
        %p255 = pneg %p44
        %p256 = pneg %p41
        %p257 = pneg %p65
        %p258 = pneg %p62
        %p259 = pneg %p86
        %p260 = pneg %p83
        %p261 = pneg %p107
        %p262 = pneg %p104
        %p263 = pneg %p128
        %p264 = pneg %p125
        %p265 = pneg %p154
        %p266 = pneg %p151
        %s267 = sand.u32 %s141, 1
        %s268 = scalar_lea.sflag [#allocation4], %s267
        %s269 = sand.u32 %s141, 1
        %s270 = scalar_lea.vmem [#allocation8], %s269
        %s271 = smul.u32 32, %s23
        %v273 = vld [vmem:[%s237] sm:$0xf]
        %v274 = vld [vmem:[%s237 + $0x4] sm:$0xf]
        %v275 = vld [vmem:[%s237 + $0x8] sm:$0xf]
        %v276 = vld [vmem:[%s237 + $0xc] sm:$0xf]
        %v277 = vld [vmem:[%s237 + $0x10] sm:$0xf]
        %v278 = vld [vmem:[%s237 + $0x14] sm:$0xf]
        %v279 = vld [vmem:[%s237 + $0x18] sm:$0xf]
        %v280 = vld [vmem:[%s237 + $0x1c] sm:$0xf]
        %v281 = vld [vmem:[%s237 + $0x20] sm:$0xf]
        %v282 = vld [vmem:[%s237 + $0x24] sm:$0xf]
        %v283 = vld [vmem:[%s237 + $0x28] sm:$0xf]
        %v284 = vld [vmem:[%s237 + $0x2c] sm:$0xf]
        %v285 = vld [vmem:[%s237 + $0x30] sm:$0xf]
        %v286 = vld [vmem:[%s237 + $0x34] sm:$0xf]
        %v287 = vld [vmem:[%s237 + $0x38] sm:$0xf]
        %v288 = vld [vmem:[%s237 + $0x3c] sm:$0xf]
        %v289 = vld [vmem:[%s237 + $0x40] sm:$0xf]
        %v290 = vld [vmem:[%s237 + $0x44] sm:$0xf]
        %v291 = vld [vmem:[%s237 + $0x48] sm:$0xf]
        %v292 = vld [vmem:[%s237 + $0x4c] sm:$0xf]
        %v293 = vld [vmem:[%s237 + $0x50] sm:$0xf]
        %v294 = vld [vmem:[%s237 + $0x54] sm:$0xf]
        %v295 = vld [vmem:[%s237 + $0x58] sm:$0xf]
        %v296 = vld [vmem:[%s237 + $0x5c] sm:$0xf]
        %v297 = vld [vmem:[%s237 + $0x60] sm:$0xf]
        %v298 = vld [vmem:[%s237 + $0x64] sm:$0xf]
        %v299 = vld [vmem:[%s237 + $0x68] sm:$0xf]
        %v300 = vld [vmem:[%s237 + $0x6c] sm:$0xf]
        %v301 = vld [vmem:[%s237 + $0x70] sm:$0xf]
        %v302 = vld [vmem:[%s237 + $0x74] sm:$0xf]
        %v303 = vld [vmem:[%s237 + $0x78] sm:$0xf]
        %v304 = vld [vmem:[%s237 + $0x7c] sm:$0xf]
        %v305 = vld [vmem:[#allocation5] sm:$0xf]
        %v306 = vld [vmem:[#allocation5 + $0x4] sm:$0xf]
        %v307 = vld [vmem:[#allocation5 + $0x8] sm:$0xf]
        %v308 = vld [vmem:[#allocation5 + $0xc] sm:$0xf]
        %v309 = vld [vmem:[#allocation5 + $0x10] sm:$0xf]
        %v310 = vld [vmem:[#allocation5 + $0x14] sm:$0xf]
        %v311 = vld [vmem:[#allocation5 + $0x18] sm:$0xf]
        %v312 = vld [vmem:[#allocation5 + $0x1c] sm:$0xf]
        %v313 = vld [vmem:[#allocation5 + $0x20] sm:$0xf]
        %v314 = vld [vmem:[#allocation5 + $0x24] sm:$0xf]
        %v315 = vld [vmem:[#allocation5 + $0x28] sm:$0xf]
        %v316 = vld [vmem:[#allocation5 + $0x2c] sm:$0xf]
        %v317 = vld [vmem:[#allocation5 + $0x30] sm:$0xf]
        %v318 = vld [vmem:[#allocation5 + $0x34] sm:$0xf]
        %v319 = vld [vmem:[#allocation5 + $0x38] sm:$0xf]
        %v320 = vld [vmem:[#allocation5 + $0x3c] sm:$0xf]
        %v321 = vld [vmem:[%s2] sm:$0x1]
        %v323 = vlaneseq
        %v324 = vshrl.u32 %v323, 7
        %v325 = vsub.s32 0, %v324
        %v326 = vrot.slane %v321, %v325
        %v360 = vunpack.c.l.b16 %v273
        %v361 = vunpack.c.l.b16 %v274
        %v362 = vunpack.c.l.b16 %v275
        %v363 = vunpack.c.l.b16 %v276
        %v364 = vunpack.c.l.b16 %v277
        %v365 = vunpack.c.l.b16 %v278
        %v366 = vunpack.c.l.b16 %v279
        %v367 = vunpack.c.l.b16 %v280
        %v368 = vunpack.c.l.b16 %v281
        %v369 = vunpack.c.l.b16 %v282
        %v370 = vunpack.c.l.b16 %v283
        %v371 = vunpack.c.l.b16 %v284
        %v372 = vunpack.c.l.b16 %v285
        %v373 = vunpack.c.l.b16 %v286
        %v374 = vunpack.c.l.b16 %v287
        %v375 = vunpack.c.l.b16 %v288
        %v376 = vunpack.c.l.b16 %v289
        %v377 = vunpack.c.l.b16 %v290
        %v378 = vunpack.c.l.b16 %v291
        %v379 = vunpack.c.l.b16 %v292
        %v380 = vunpack.c.l.b16 %v293
        %v381 = vunpack.c.l.b16 %v294
        %v382 = vunpack.c.l.b16 %v295
        %v383 = vunpack.c.l.b16 %v296
        %v384 = vunpack.c.l.b16 %v297
        %v385 = vunpack.c.l.b16 %v298
        %v386 = vunpack.c.l.b16 %v299
        %v387 = vunpack.c.l.b16 %v300
        %v388 = vunpack.c.l.b16 %v301
        %v389 = vunpack.c.l.b16 %v302
        %v390 = vunpack.c.l.b16 %v303
        %v391 = vunpack.c.l.b16 %v304
        %v392 = vpack.c.b16 %v361, %v360
        %v393 = vpack.c.b16 %v363, %v362
        %v394 = vpack.c.b16 %v365, %v364
        %v395 = vpack.c.b16 %v367, %v366
        %v396 = vpack.c.b16 %v369, %v368
        %v397 = vpack.c.b16 %v371, %v370
        %v398 = vpack.c.b16 %v373, %v372
        %v399 = vpack.c.b16 %v375, %v374
        %v400 = vpack.c.b16 %v377, %v376
        %v401 = vpack.c.b16 %v379, %v378
        %v402 = vpack.c.b16 %v381, %v380
        %v403 = vpack.c.b16 %v383, %v382
        %v404 = vpack.c.b16 %v385, %v384
        %v405 = vpack.c.b16 %v387, %v386
        %v406 = vpack.c.b16 %v389, %v388
        %v407 = vpack.c.b16 %v391, %v390
        %v440 = vunpack.c.l.b16 %v305
        %v441 = vunpack.c.l.b16 %v306
        %v442 = vunpack.c.l.b16 %v307
        %v443 = vunpack.c.l.b16 %v308
        %v444 = vunpack.c.l.b16 %v309
        %v445 = vunpack.c.l.b16 %v310
        %v446 = vunpack.c.l.b16 %v311
        %v447 = vunpack.c.l.b16 %v312
        %v448 = vunpack.c.l.b16 %v313
        %v449 = vunpack.c.l.b16 %v314
        %v450 = vunpack.c.l.b16 %v315
        %v451 = vunpack.c.l.b16 %v316
        %v452 = vunpack.c.l.b16 %v317
        %v453 = vunpack.c.l.b16 %v318
        %v454 = vunpack.c.l.b16 %v319
        %v455 = vunpack.c.l.b16 %v320
        %v456 = vpack.c.b16 %v441, %v440
        %v457 = vpack.c.b16 %v443, %v442
        %v458 = vpack.c.b16 %v445, %v444
        %v459 = vpack.c.b16 %v447, %v446
        %v460 = vpack.c.b16 %v449, %v448
        %v461 = vpack.c.b16 %v451, %v450
        %v462 = vpack.c.b16 %v453, %v452
        %v463 = vpack.c.b16 %v455, %v454
        %472 = vmatprep.subr.bf16.mxu0 0
        %473 = vmatpush1.bf16.msra.mxu0 %v456
        %474 = vmatprep.subr.bf16.mxu0 0
        %475 = vmatpush1.bf16.msra.mxu0 %v457
        %476 = vmatprep.subr.bf16.mxu0 0
        %477 = vmatpush1.bf16.msra.mxu0 %v458
        %478 = vmatprep.subr.bf16.mxu0 0
        %479 = vmatpush1.bf16.msra.mxu0 %v459
        %480 = vmatprep.subr.bf16.mxu0 0
        %481 = vmatpush1.bf16.msra.mxu0 %v460
        %482 = vmatprep.subr.bf16.mxu0 0
        %483 = vmatpush1.bf16.msra.mxu0 %v461
        %484 = vmatprep.subr.bf16.mxu0 0
        %485 = vmatpush1.bf16.msra.mxu0 %v462
        %486 = vmatprep.subr.bf16.mxu0 0
        %487 = vmatpush1.bf16.msra.mxu0 %v463
        %488 = vmatprep.subr.bf16.mxu0 0
        %489 = vmatpush1.bf16.msra.mxu0 0
        %490 = vmatprep.subr.bf16.mxu0 0
        %491 = vmatpush1.bf16.msra.mxu0 0
        %492 = vmatprep.subr.bf16.mxu0 0
        %493 = vmatpush1.bf16.msra.mxu0 0
        %494 = vmatprep.subr.bf16.mxu0 0
        %495 = vmatpush1.bf16.msra.mxu0 0
        %496 = vmatprep.subr.bf16.mxu0 0
        %497 = vmatpush1.bf16.msra.mxu0 0
        %498 = vmatprep.subr.bf16.mxu0 0
        %499 = vmatpush1.bf16.msra.mxu0 0
        %500 = vmatprep.subr.bf16.mxu0 0
        %501 = vmatpush1.bf16.msra.mxu0 0
        %502 = vmatprep.subr.bf16.mxu0 0
        %503 = vmatpush1.bf16.msra.mxu0 0
        %504 = vmatprep.mubr.bf16.mxu0 0
        %505 = vmatmul.mubr.bf16.gmra.mrb[0].mxu0 %v392
        %v506 = vpop.f32.mrb[0].mxu0
        %v507 = vadd.f32 %v326, %v506
        %v508 = vpop.f32.mrb[0].mxu0
        %v509 = vpop.f32.mrb[0].mxu0
        %v510 = vadd.f32 %v326, %v509
        %v511 = vpop.f32.mrb[0].mxu0
        %512 = vmatprep.mubr.bf16.mxu0 0
        %513 = vmatmul.mubr.bf16.gmra.mrb[0].mxu0 %v393
        %v514 = vpop.f32.mrb[0].mxu0
        %v515 = vadd.f32 %v326, %v514
        %v516 = vpop.f32.mrb[0].mxu0
        %v517 = vpop.f32.mrb[0].mxu0
        %v518 = vadd.f32 %v326, %v517
        %v519 = vpop.f32.mrb[0].mxu0
        %520 = vmatprep.mubr.bf16.mxu0 0
        %521 = vmatmul.mubr.bf16.gmra.mrb[0].mxu0 %v394
        %v522 = vpop.f32.mrb[0].mxu0
        %v523 = vadd.f32 %v326, %v522
        %v524 = vpop.f32.mrb[0].mxu0
        %v525 = vpop.f32.mrb[0].mxu0
        %v526 = vadd.f32 %v326, %v525
        %v527 = vpop.f32.mrb[0].mxu0
        %528 = vmatprep.mubr.bf16.mxu0 0
        %529 = vmatmul.mubr.bf16.gmra.mrb[0].mxu0 %v395
        %v530 = vpop.f32.mrb[0].mxu0
        %v531 = vadd.f32 %v326, %v530
        %v532 = vpop.f32.mrb[0].mxu0
        %v533 = vpop.f32.mrb[0].mxu0
        %v534 = vadd.f32 %v326, %v533
        %v535 = vpop.f32.mrb[0].mxu0
        %536 = vmatprep.mubr.bf16.mxu0 0
        %537 = vmatmul.mubr.bf16.gmra.mrb[0].mxu0 %v396
        %v538 = vpop.f32.mrb[0].mxu0
        %v539 = vadd.f32 %v326, %v538
        %v540 = vpop.f32.mrb[0].mxu0
        %v541 = vpop.f32.mrb[0].mxu0
        %v542 = vadd.f32 %v326, %v541
        %v543 = vpop.f32.mrb[0].mxu0
        %544 = vmatprep.mubr.bf16.mxu0 0
        %545 = vmatmul.mubr.bf16.gmra.mrb[0].mxu0 %v397
        %v546 = vpop.f32.mrb[0].mxu0
        %v547 = vadd.f32 %v326, %v546
        %v548 = vpop.f32.mrb[0].mxu0
        %v549 = vpop.f32.mrb[0].mxu0
        %v550 = vadd.f32 %v326, %v549
        %v551 = vpop.f32.mrb[0].mxu0
        %552 = vmatprep.mubr.bf16.mxu0 0
        %553 = vmatmul.mubr.bf16.gmra.mrb[0].mxu0 %v398
        %v554 = vpop.f32.mrb[0].mxu0
        %v555 = vadd.f32 %v326, %v554
        %v556 = vpop.f32.mrb[0].mxu0
        %v557 = vpop.f32.mrb[0].mxu0
        %v558 = vadd.f32 %v326, %v557
        %v559 = vpop.f32.mrb[0].mxu0
        %560 = vmatprep.mubr.bf16.mxu0 0
        %561 = vmatmul.mubr.bf16.gmra.mrb[0].mxu0 %v399
        %v562 = vpop.f32.mrb[0].mxu0
        %v563 = vadd.f32 %v326, %v562
        %v564 = vpop.f32.mrb[0].mxu0
        %v565 = vpop.f32.mrb[0].mxu0
        %v566 = vadd.f32 %v326, %v565
        %v567 = vpop.f32.mrb[0].mxu0
        %568 = vmatprep.mubr.bf16.mxu0 0
        %569 = vmatmul.mubr.bf16.gmra.mrb[0].mxu0 %v400
        %v570 = vpop.f32.mrb[0].mxu0
        %v571 = vadd.f32 %v326, %v570
        %v572 = vpop.f32.mrb[0].mxu0
        %v573 = vpop.f32.mrb[0].mxu0
        %v574 = vadd.f32 %v326, %v573
        %v575 = vpop.f32.mrb[0].mxu0
        %576 = vmatprep.mubr.bf16.mxu0 0
        %577 = vmatmul.mubr.bf16.gmra.mrb[0].mxu0 %v401
        %v578 = vpop.f32.mrb[0].mxu0
        %v579 = vadd.f32 %v326, %v578
        %v580 = vpop.f32.mrb[0].mxu0
        %v581 = vpop.f32.mrb[0].mxu0
        %v582 = vadd.f32 %v326, %v581
        %v583 = vpop.f32.mrb[0].mxu0
        %584 = vmatprep.mubr.bf16.mxu0 0
        %585 = vmatmul.mubr.bf16.gmra.mrb[0].mxu0 %v402
        %v586 = vpop.f32.mrb[0].mxu0
        %v587 = vadd.f32 %v326, %v586
        %v588 = vpop.f32.mrb[0].mxu0
        %v589 = vpop.f32.mrb[0].mxu0
        %v590 = vadd.f32 %v326, %v589
        %v591 = vpop.f32.mrb[0].mxu0
        %592 = vmatprep.mubr.bf16.mxu0 0
        %593 = vmatmul.mubr.bf16.gmra.mrb[0].mxu0 %v403
        %v594 = vpop.f32.mrb[0].mxu0
        %v595 = vadd.f32 %v326, %v594
        %v596 = vpop.f32.mrb[0].mxu0
        %v597 = vpop.f32.mrb[0].mxu0
        %v598 = vadd.f32 %v326, %v597
        %v599 = vpop.f32.mrb[0].mxu0
        %600 = vmatprep.mubr.bf16.mxu0 0
        %601 = vmatmul.mubr.bf16.gmra.mrb[0].mxu0 %v404
        %v602 = vpop.f32.mrb[0].mxu0
        %v603 = vadd.f32 %v326, %v602
        %v604 = vpop.f32.mrb[0].mxu0
        %v605 = vpop.f32.mrb[0].mxu0
        %v606 = vadd.f32 %v326, %v605
        %v607 = vpop.f32.mrb[0].mxu0
        %608 = vmatprep.mubr.bf16.mxu0 0
        %609 = vmatmul.mubr.bf16.gmra.mrb[0].mxu0 %v405
        %v610 = vpop.f32.mrb[0].mxu0
        %v611 = vadd.f32 %v326, %v610
        %v612 = vpop.f32.mrb[0].mxu0
        %v613 = vpop.f32.mrb[0].mxu0
        %v614 = vadd.f32 %v326, %v613
        %v615 = vpop.f32.mrb[0].mxu0
        %616 = vmatprep.mubr.bf16.mxu0 0
        %617 = vmatmul.mubr.bf16.gmra.mrb[0].mxu0 %v406
        %v618 = vpop.f32.mrb[0].mxu0
        %v619 = vadd.f32 %v326, %v618
        %v620 = vpop.f32.mrb[0].mxu0
        %v621 = vpop.f32.mrb[0].mxu0
        %v622 = vadd.f32 %v326, %v621
        %v623 = vpop.f32.mrb[0].mxu0
        %624 = vmatprep.mubr.bf16.mxu0 0
        %625 = vmatmul.mubr.bf16.gmra.mrb[0].mxu0 %v407
        %v626 = vpop.f32.mrb[0].mxu0
        %v627 = vadd.f32 %v326, %v626
        %v628 = vpop.f32.mrb[0].mxu0
        %v629 = vpop.f32.mrb[0].mxu0
        %v630 = vadd.f32 %v326, %v629
        %v631 = vpop.f32.mrb[0].mxu0
        %632 = vdwg.mxu0
        %v633 = vmax.f32 %v507, 0.0
        %v634 = vmax.f32 %v510, 0.0
        %v635 = vmax.f32 %v515, 0.0
        %v636 = vmax.f32 %v518, 0.0
        %v637 = vmax.f32 %v523, 0.0
        %v638 = vmax.f32 %v526, 0.0
        %v639 = vmax.f32 %v531, 0.0
        %v640 = vmax.f32 %v534, 0.0
        %v641 = vmax.f32 %v539, 0.0
        %v642 = vmax.f32 %v542, 0.0
        %v643 = vmax.f32 %v547, 0.0
        %v644 = vmax.f32 %v550, 0.0
        %v645 = vmax.f32 %v555, 0.0
        %v646 = vmax.f32 %v558, 0.0
        %v647 = vmax.f32 %v563, 0.0
        %v648 = vmax.f32 %v566, 0.0
        %v649 = vmax.f32 %v571, 0.0
        %v650 = vmax.f32 %v574, 0.0
        %v651 = vmax.f32 %v579, 0.0
        %v652 = vmax.f32 %v582, 0.0
        %v653 = vmax.f32 %v587, 0.0
        %v654 = vmax.f32 %v590, 0.0
        %v655 = vmax.f32 %v595, 0.0
        %v656 = vmax.f32 %v598, 0.0
        %v657 = vmax.f32 %v603, 0.0
        %v658 = vmax.f32 %v606, 0.0
        %v659 = vmax.f32 %v611, 0.0
        %v660 = vmax.f32 %v614, 0.0
        %v661 = vmax.f32 %v619, 0.0
        %v662 = vmax.f32 %v622, 0.0
        %v663 = vmax.f32 %v627, 0.0
        %v664 = vmax.f32 %v630, 0.0
        %v665 = vlaneseq
        %v666 = vshrl.u32 %v665, 7
        %v667 = vadd.f32 %v633, %v634
        %v668 = vadd.f32 %v667, %v635
        %v669 = vadd.f32 %v668, %v636
        %v670 = vadd.f32 %v669, %v637
        %v671 = vadd.f32 %v670, %v638
        %v672 = vadd.f32 %v671, %v639
        %v673 = vadd.f32 %v672, %v640
        %v674 = vadd.f32 %v673, %v641
        %v675 = vadd.f32 %v674, %v642
        %v676 = vadd.f32 %v675, %v643
        %v677 = vadd.f32 %v676, %v644
        %v678 = vadd.f32 %v677, %v645
        %v679 = vadd.f32 %v678, %v646
        %v680 = vadd.f32 %v679, %v647
        %v681 = vadd.f32 %v680, %v648
        %v682 = vadd.f32 %v681, %v649
        %v683 = vadd.f32 %v682, %v650
        %v684 = vadd.f32 %v683, %v651
        %v685 = vadd.f32 %v684, %v652
        %v686 = vadd.f32 %v685, %v653
        %v687 = vadd.f32 %v686, %v654
        %v688 = vadd.f32 %v687, %v655
        %v689 = vadd.f32 %v688, %v656
        %v690 = vadd.f32 %v689, %v657
        %v691 = vadd.f32 %v690, %v658
        %v692 = vadd.f32 %v691, %v659
        %v693 = vadd.f32 %v692, %v660
        %v694 = vadd.f32 %v693, %v661
        %v695 = vadd.f32 %v694, %v662
        %v696 = vadd.f32 %v695, %v663
        %v697 = vadd.f32 %v696, %v664
        %v698 = vrot.slane %v697, 4
        %v699 = vadd.f32 %v697, %v698
        %v700 = vrot.slane %v699, 2
        %v701 = vadd.f32 %v699, %v700
        %v702 = vrot.slane %v701, 1
        %v703 = vadd.f32 %v701, %v702
        %vm704 = vcmp.eq.s32.totalorder %v666, 0
        %v705 = vsel %vm704, %v703, 0.0
        %v706 = vadd.f32 %v705, 0.0
        %v707 = vmul.f32 %v706, 0.00390625
        %v708 = vpack.c.bf16 %v707, %v707
        %v709 = vld [vmem:[#allocation7] sm:$0xf]
        %v710 = vld [vmem:[#allocation7 + $0x4] sm:$0xf]
        %v711 = vld [vmem:[#allocation7 + $0x8] sm:$0xf]
        %v712 = vld [vmem:[#allocation7 + $0xc] sm:$0xf]
        %v713 = vld [vmem:[#allocation7 + $0x10] sm:$0xf]
        %v714 = vld [vmem:[#allocation7 + $0x14] sm:$0xf]
        %v715 = vld [vmem:[#allocation7 + $0x18] sm:$0xf]
        %v716 = vld [vmem:[#allocation7 + $0x1c] sm:$0xf]
        %v717 = vld [vmem:[#allocation7 + $0x20] sm:$0xf]
        %v718 = vld [vmem:[#allocation7 + $0x24] sm:$0xf]
        %v719 = vld [vmem:[#allocation7 + $0x28] sm:$0xf]
        %v720 = vld [vmem:[#allocation7 + $0x2c] sm:$0xf]
        %v721 = vld [vmem:[#allocation7 + $0x30] sm:$0xf]
        %v722 = vld [vmem:[#allocation7 + $0x34] sm:$0xf]
        %v723 = vld [vmem:[#allocation7 + $0x38] sm:$0xf]
        %v724 = vld [vmem:[#allocation7 + $0x3c] sm:$0xf]
        %v725 = vld [vmem:[%s4] sm:$0x1]
        %v742 = vunpack.c.l.b16 %v709
        %v743 = vunpack.c.l.b16 %v710
        %v744 = vunpack.c.l.b16 %v711
        %v745 = vunpack.c.l.b16 %v712
        %v746 = vunpack.c.l.b16 %v713
        %v747 = vunpack.c.l.b16 %v714
        %v748 = vunpack.c.l.b16 %v715
        %v749 = vunpack.c.l.b16 %v716
        %v750 = vunpack.c.l.b16 %v717
        %v751 = vunpack.c.l.b16 %v718
        %v752 = vunpack.c.l.b16 %v719
        %v753 = vunpack.c.l.b16 %v720
        %v754 = vunpack.c.l.b16 %v721
        %v755 = vunpack.c.l.b16 %v722
        %v756 = vunpack.c.l.b16 %v723
        %v757 = vunpack.c.l.b16 %v724
        %v758 = vpack.c.b16 %v743, %v742
        %v759 = vpack.c.b16 %v745, %v744
        %v760 = vpack.c.b16 %v747, %v746
        %v761 = vpack.c.b16 %v749, %v748
        %v762 = vpack.c.b16 %v751, %v750
        %v763 = vpack.c.b16 %v753, %v752
        %v764 = vpack.c.b16 %v755, %v754
        %v765 = vpack.c.b16 %v757, %v756
        %774 = vmatprep.subr.bf16.mxu0 0
        %775 = vmatpush1.bf16.msra.mxu0 %v758
        %776 = vmatprep.subr.bf16.mxu0 0
        %777 = vmatpush1.bf16.msra.mxu0 %v759
        %778 = vmatprep.subr.bf16.mxu0 0
        %779 = vmatpush1.bf16.msra.mxu0 %v760
        %780 = vmatprep.subr.bf16.mxu0 0
        %781 = vmatpush1.bf16.msra.mxu0 %v761
        %782 = vmatprep.subr.bf16.mxu0 0
        %783 = vmatpush1.bf16.msra.mxu0 %v762
        %784 = vmatprep.subr.bf16.mxu0 0
        %785 = vmatpush1.bf16.msra.mxu0 %v763
        %786 = vmatprep.subr.bf16.mxu0 0
        %787 = vmatpush1.bf16.msra.mxu0 %v764
        %788 = vmatprep.subr.bf16.mxu0 0
        %789 = vmatpush1.bf16.msra.mxu0 %v765
        %790 = vmatprep.subr.bf16.mxu0 0
        %791 = vmatpush1.bf16.msra.mxu0 0
        %792 = vmatprep.subr.bf16.mxu0 0
        %793 = vmatpush1.bf16.msra.mxu0 0
        %794 = vmatprep.subr.bf16.mxu0 0
        %795 = vmatpush1.bf16.msra.mxu0 0
        %796 = vmatprep.subr.bf16.mxu0 0
        %797 = vmatpush1.bf16.msra.mxu0 0
        %798 = vmatprep.subr.bf16.mxu0 0
        %799 = vmatpush1.bf16.msra.mxu0 0
        %800 = vmatprep.subr.bf16.mxu0 0
        %801 = vmatpush1.bf16.msra.mxu0 0
        %802 = vmatprep.subr.bf16.mxu0 0
        %803 = vmatpush1.bf16.msra.mxu0 0
        %804 = vmatprep.subr.bf16.mxu0 0
        %805 = vmatpush1.bf16.msra.mxu0 0
        %806 = vmatprep.mubr.bf16.mxu0 0
        %807 = vmatmul.mubr.bf16.gmra.mrb[0].mxu0 %v708
        %v808 = vpop.f32.mrb[0].mxu0
        %v809 = vadd.f32 %v725, %v808
        %v810 = vpop.f32.mrb[0].mxu0
        %v811 = vpop.f32.mrb[0].mxu0
        %v812 = vpop.f32.mrb[0].mxu0
        %813 = vdwg.mxu0
        %814 = vst [vmem:[%s270] sm:$0x1] %v809
        %s815 = sand.u32 %s141, 1
        %s816 = scalar_lea.sflag [#allocation4], %s815
        %s817 = sand.u32 %s141, 1
        %s818 = scalar_lea.vmem [#allocation8], %s817
        // Predicated region
        $region53: #{tpu_custom_call.1} parent=39 // pred_check
          %p819 = pneg %p151
        $region54: #{tpu_custom_call.1} parent=39 // pred_check_branch
          %821 = sbr.rel (%p819) target = $region56
        $region55: #{tpu_custom_call.1} parent=39 // pred_region
          %s823 = ssub.s32 16, 16
          %824 = vsyncadd %s816, %s823
          %s825 = smul.addr %s23, 16
          %s826 = scalar_lea.hbm %s5, %s825
          %s828 = sshll.u32 %s818, 4
          %s829 = int_to_ptr.vmem [resolvable:$true] %s828
          %831 = dma.vmem_to_hbm [thread:$0]  %s829, 16, %s826, %s816
        $region56: #{tpu_custom_call.1} parent=39 // pred_fallthru
          _
      $region40: #{tpu_custom_call.1} parent=5 // pred_fallthru
        _
      %p832 = scmp.le.s32.totalorder 2, %s18
      // Predicated region
      $region57: #{tpu_custom_call.1} parent=5 // pred_check
        %p833 = pneg %p832
      $region58: #{tpu_custom_call.1} parent=5 // pred_check_branch
        %835 = sbr.rel (%p833) target = $region60
      $region59: #{tpu_custom_call.1} parent=5 // pred_region
        %s836 = ssub.s32 %s18, 2
        // Predicated region
        $region61: #{tpu_custom_call.1} parent=59 // pred_check
          %p837 = pneg %p157
        $region62: #{tpu_custom_call.1} parent=59 // pred_check_branch
          %839 = sbr.rel (%p837) target = $region64
        $region63: #{tpu_custom_call.1} parent=59 // pred_region
          %s840 = sand.u32 %s142, 1
          %s841 = scalar_lea.sflag [#allocation4], %s840
          %s842 = sand.u32 %s142, 1
          %s843 = scalar_lea.vmem [#allocation8], %s842
          %844 = dma.done %s841, 16
        $region64: #{tpu_custom_call.1} parent=59 // pred_fallthru
          _
      $region60: #{tpu_custom_call.1} parent=5 // pred_fallthru
        _
    $region6: #{tpu_custom_call.1} parent=1 // loop_footer
      %s22 = sadd.s32 1, %s18
    $region7: #{tpu_custom_call.1} parent=1 // loop_footer_branch
      %17 = sbr.rel target = $region3
    $region8: #{tpu_custom_call.1} parent=1 // loop_exit
      _
    %845 = vsyncpa [#allocation3], 1
    %s846 = scalar_lea.sflag [#allocation3], 1
    %847 = vsyncpa %s846, 1
    %848 = vsyncpa [#allocation6], 1
    %849 = vsyncpa [#allocation4], 1
    %s850 = scalar_lea.sflag [#allocation4], 1
    %851 = vsyncpa %s850, 1

</llo_original>
